<compile_context>
chip_gen: v6e
topology: v6e:2x2x1
jax: 0.10.0
libtpu: 0.0.40
codegen_flags: <defaults>
</compile_context>

<pallas_src>
import math
import functools

import jax
import jax.numpy as jnp
from jax.experimental import pallas as pl
from jax.experimental.pallas import tpu as pltpu


def make_pe_table(d_model: int, max_len: int) -> jnp.ndarray:
    """Deterministic sinusoidal positional-encoding table, shape (max_len, d_model)."""
    position = jnp.arange(0, max_len, dtype=jnp.float32)[:, None]            # (max_len, 1)
    div_term = jnp.exp(jnp.arange(0, d_model, 2, dtype=jnp.float32)
                       * (-math.log(10000.0) / d_model))                     # (d_model/2,)
    angles = position * div_term                                             # (max_len, d_model/2)
    pe = jnp.zeros((max_len, d_model), dtype=jnp.float32)
    pe = pe.at[:, 0::2].set(jnp.sin(angles))
    pe = pe.at[:, 1::2].set(jnp.cos(angles))
    return pe


def _hash_u32(x):
    """lowbias32 integer mixer (uint32 -> uint32); plain VPU ops, no PRNG state."""
    x = x ^ (x >> jnp.uint32(16))
    x = x * jnp.uint32(0x7FEB352D)
    x = x ^ (x >> jnp.uint32(15))
    x = x * jnp.uint32(0x846CA68B)
    x = x ^ (x >> jnp.uint32(16))
    return x


def _pe_kernel(seed_ref, x_ref, pe_ref, o_ref, *, batch, dropout_p, train):
    # x_ref / o_ref: (ts, B*D) lane-dense VMEM tiles; pe_ref: (ts, D); seed_ref: SMEM (1,).
    x = x_ref[...]
    pe = pe_ref[...]                                   # already x.dtype (cast in wrapper)
    if batch > 1:
        # Widen (ts, D) -> (ts, B*D): concatenate along the lane axis (Mosaic-friendly).
        pe = jnp.concatenate([pe] * batch, axis=-1)
    y = x + pe

    if train and dropout_p > 0.0:
        ts, width = y.shape
        # Stateless counter-based PRNG: hash(global element id, seed). Independent per
        # element, so grid steps / cores can run in any order ("parallel" is safe).
        rows = jax.lax.broadcasted_iota(jnp.uint32, (ts, width), 0)
        cols = jax.lax.broadcasted_iota(jnp.uint32, (ts, width), 1)
        row_off = (pl.program_id(0) * ts).astype(jnp.uint32)
        gid = (rows + row_off) * jnp.uint32(width) + cols
        seed_u = seed_ref[0].astype(jnp.uint32)
        bits = _hash_u32(gid ^ _hash_u32(seed_u ^ jnp.uint32(0x9E3779B9)))
        # Drop with probability p: P(bits < thr) = p.  (p >= 1.0 handled in wrapper.)
        threshold = jnp.uint32(min(int(dropout_p * 4294967296.0), 4294967295))
        keep = (bits >= threshold).astype(y.dtype)
        scale = jnp.asarray(1.0 / (1.0 - dropout_p), dtype=y.dtype)
        y = y * (keep * scale)                          # fused mask + inverted-dropout scale

    o_ref[...] = y.astype(o_ref.dtype)


def _pick_seq_tile(S, row_bytes, target_tile_bytes=1 << 20):
    """Largest seq tile that divides S, is a multiple of 8 (sublane), and keeps the
    tile near ~1 MiB so double-buffered in/out tiles fit every TPU generation's
    scoped VMEM while still hitting the HBM roofline."""
    if S * row_bytes <= target_tile_bytes:
        return S
    best = None
    ts = 8
    while ts < S:
        if S % ts == 0 and ts * row_bytes <= target_tile_bytes:
            best = ts
        ts += 8
    return best if best is not None else S


def positional_encoding(x, pe_table, *, dropout_p=0.1, train=False, seed=0, seq_tile=None):
    """x: (S, B, D). pe_table: (max_len, D). Returns (S, B, D) = dropout(x + pe[:S])."""
    S, B, D = x.shape
    if train and dropout_p >= 1.0:
        return jnp.zeros_like(x)                       # PyTorch Dropout(p=1.0) -> all zeros

    pe = pe_table[:S].astype(x.dtype)                  # slice + cast once in the wrapper
    x2 = x.reshape(S, B * D)                           # free view: lane-dense last dim

    row_bytes = B * D * x2.dtype.itemsize
    ts = seq_tile if seq_tile is not None else _pick_seq_tile(S, row_bytes)
    assert S % ts == 0, "seq length must be divisible by seq tile"
    assert ts % 8 == 0 or ts == S, "seq tile must be a multiple of 8 or the full length"
    grid = (S // ts,)

    seed_arr = jnp.asarray([int(seed)], dtype=jnp.int32)
    kernel = functools.partial(_pe_kernel, batch=B,
                               dropout_p=float(dropout_p), train=bool(train))

    out2 = pl.pallas_call(
        kernel,
        out_shape=jax.ShapeDtypeStruct((S, B * D), x.dtype),
        grid_spec=pl.GridSpec(
            grid=grid,
            in_specs=[
                pl.BlockSpec(memory_space=pltpu.SMEM),              # seed scalar
                pl.BlockSpec((ts, B * D), lambda i: (i, 0)),        # x tile (lane-dense)
                pl.BlockSpec((ts, D), lambda i: (i, 0)),            # pe tile
            ],
            out_specs=pl.BlockSpec((ts, B * D), lambda i: (i, 0)),
        ),
        compiler_params=pltpu.CompilerParams(
            dimension_semantics=("parallel",),          # order-independent -> v7x dual-TC
            vmem_limit_bytes=32 * 1024 * 1024,
        ),
    )(seed_arr, x2, pe)
    return out2.reshape(S, B, D)


if __name__ == "__main__":
    # Small shapes consistent with the module: seq=8, batch=2, d_model=32.
    S, B, D = 8, 2, 32
    max_len = 64

    key = jax.random.PRNGKey(0)
    x = jax.random.normal(key, (S, B, D), dtype=jnp.float32)
    pe_table = make_pe_table(D, max_len)

    # Eval mode (dropout is identity) — deterministic check vs. pure-JAX reference.
    out_eval = jax.block_until_ready(
        positional_encoding(x, pe_table, dropout_p=0.1, train=False))
    ref = x + pe_table[:S][:, None, :]
    assert jnp.allclose(out_eval, ref, atol=1e-6), "eval-mode mismatch vs reference"

    # Train mode (inverted dropout inside the kernel).
    p = 0.1
    out_train = jax.block_until_ready(
        positional_encoding(x, pe_table, dropout_p=p, train=True, seed=1234))
    assert out_train.shape == (S, B, D)
    kept = out_train != 0
    scaled = ref / (1.0 - p)
    assert jnp.allclose(jnp.where(kept, out_train, 0.0),
                        jnp.where(kept, scaled, 0.0), atol=1e-5), "kept values wrong"
    drop_frac = float(1.0 - jnp.mean(kept.astype(jnp.float32)))
    assert 0.0 < drop_frac < 0.5, f"dropout rate implausible: {drop_frac}"

    print("KERNEL_OK")
</pallas_src>

<mosaic_0001>
module attributes {stable_mosaic.version = 11 : i64} {
  func.func @_pe_kernel(%arg0: i32, %arg1: memref<1xi32, #tpu.memory_space<smem>>, %arg2: memref<8x64xf32, #tpu.memory_space<vmem>>, %arg3: memref<8x32xf32, #tpu.memory_space<vmem>>, %arg4: memref<8x64xf32, #tpu.memory_space<vmem>>) attributes {dimension_semantics = [#tpu.dimension_semantics<parallel>], iteration_bounds = array<i64: 1>, scalar_prefetch = 0 : i64, scratch_operands = 0 : i64, tpu.core_type = #tpu.core_type<tc>, window_params = [{transform_indices = @transform_0, window_bounds = array<i64: 1>}, {transform_indices = @transform_1, window_bounds = array<i64: 8, 64>}, {transform_indices = @transform_2, window_bounds = array<i64: 8, 32>}, {transform_indices = @transform_3, window_bounds = array<i64: 8, 64>}]} {
    %c0 = arith.constant 0 : index
    %c0_0 = arith.constant 0 : index
    %0 = vector.load %arg2[%c0, %c0_0] : memref<8x64xf32, #tpu.memory_space<vmem>>, vector<8x64xf32>
    %c0_1 = arith.constant 0 : index
    %c0_2 = arith.constant 0 : index
    %1 = vector.load %arg3[%c0_1, %c0_2] : memref<8x32xf32, #tpu.memory_space<vmem>>, vector<8x32xf32>
    %2 = tpu.concatenate %1, %1 in 1 : vector<8x32xf32>, vector<8x32xf32> -> vector<8x64xf32>
    %3 = arith.addf %0, %2 : vector<8x64xf32>
    %c0_3 = arith.constant 0 : index
    %c0_4 = arith.constant 0 : index
    %4 = vector.load %arg4[%c0_3, %c0_4] : memref<8x64xf32, #tpu.memory_space<vmem>>, vector<8x64xf32>
    tpu.vector_store %arg4[%c0_3, %c0_4], %3 {strides = array<i32>} : memref<8x64xf32, #tpu.memory_space<vmem>>, vector<8x64xf32>,
    return
  }
  func.func @transform_0(%arg0: i32) -> i32 {
    %c0_i32 = arith.constant 0 : i32
    %c0_i32_0 = arith.constant 0 : i32
    return %c0_i32 : i32
  }
  func.func @transform_1(%arg0: i32) -> (i32, i32) {
    %c0_i32 = arith.constant 0 : i32
    %c0_i32_0 = arith.constant 0 : i32
    return %arg0, %c0_i32 : i32, i32
  }
  func.func @transform_2(%arg0: i32) -> (i32, i32) {
    %c0_i32 = arith.constant 0 : i32
    %c0_i32_0 = arith.constant 0 : i32
    return %arg0, %c0_i32 : i32, i32
  }
  func.func @transform_3(%arg0: i32) -> (i32, i32) {
    %c0_i32 = arith.constant 0 : i32
    %c0_i32_0 = arith.constant 0 : i32
    return %arg0, %c0_i32 : i32, i32
  }
}

</mosaic_0001>

<llo_original>
// kernel: tpu_custom_call.1
$region0: #{tpu_custom_call.1}
  #allocation0 [shape = 'u32[]', space=smem, size = 0x4, offset = 0x4, fixed_abs, tag = 'smem constant byte address 0x4 - core index']
  #allocation1 [shape = 'u32[144,128]{1,0:T(1,128)}', space=vmem, size = 0x12000, scoped, tag = 'internal scratch']
  #allocation2 [shape = 's32[1]{0:T(128)S(6)}', space=smem, size = 0x200, scoped, tag = 'scoped memory for tpu_custom_call.1']
  %s0 = inlined_call_operand.<no memory space> [shape: s32[1], index: 0, kind: input, shape index: {}]
  %s1 = inlined_call_operand.hbm [shape: f32[8,64], index: 1, kind: input, shape index: {}]
  %s2 = inlined_call_operand.hbm [shape: f32[8,32], index: 2, kind: input, shape index: {}]
  %s3 = inlined_call_operand.hbm [shape: f32[8,64], index: 3, kind: output, shape index: {}]
  %s4 = sld [smem:[#allocation0]]
  $region30: #{tpu_custom_call.1} parent=0
    _
  %s6 = ssub.s32 1, %s4
  %s7 = scalar_select 0, %s6, %s4
  %8 = sst [smem:[#allocation2]] %s0
  $region1: #{tpu_custom_call.1} parent=0
    #allocation3 [shape = 'u8[4096]{0}', space=vmem, size = 0x1000, scoped, tag = 'input window, operand 1, single buffered']
    #allocation4 [shape = 's32[1]{0}', space=sflag, size = 0x4, scoped, tag = 'scoped memory for tpu_custom_call.1']
    #allocation5 [shape = 's32[1]{0}', space=sflag, size = 0x4, scoped, tag = 'scoped memory for tpu_custom_call.1']
    #allocation6 [shape = 'u8[4096]{0}', space=vmem, size = 0x1000, scoped, tag = 'input window, operand 2, single buffered']
    #allocation7 [shape = 's32[1]{0}', space=sflag, size = 0x4, scoped, tag = 'scoped memory for tpu_custom_call.1']
    #allocation8 [shape = 'u8[4096]{0}', space=vmem, size = 0x1000, scoped, tag = 'output window, operand 0, single buffered']
    %9 = vsyncpa [#allocation4], 0
    %10 = vsyncpa [#allocation7], 0
    %11 = vsyncpa [#allocation5], 0
    // Predicated region
    $region2: #{tpu_custom_call.1} parent=1 // pred_check
      _
    $region3: #{tpu_custom_call.1} parent=1 // pred_check_branch
      %13 = sbr.rel (0) target = $region5
    $region4: #{tpu_custom_call.1} parent=1 // pred_region
      _
    $region5: #{tpu_custom_call.1} parent=1 // pred_fallthru
      _
    // Predicated region
    $region6: #{tpu_custom_call.1} parent=1 // pred_check
      _
    $region7: #{tpu_custom_call.1} parent=1 // pred_check_branch
      %15 = sbr.rel (0) target = $region9
    $region8: #{tpu_custom_call.1} parent=1 // pred_region
      %s17 = ssub.s32 128, 128
      %18 = vsyncadd [#allocation4], %s17
      %s20 = sshll.u32 [#allocation3], 4
      %s21 = int_to_ptr.vmem [resolvable:$true] %s20
      %23 = dma.hbm_to_vmem [thread:$0]  %s1, 128, %s21, [#allocation4]
    $region9: #{tpu_custom_call.1} parent=1 // pred_fallthru
      _
    // Predicated region
    $region10: #{tpu_custom_call.1} parent=1 // pred_check
      _
    $region11: #{tpu_custom_call.1} parent=1 // pred_check_branch
      %25 = sbr.rel (0) target = $region13
    $region12: #{tpu_custom_call.1} parent=1 // pred_region
      %s27 = ssub.s32 128, 128
      %28 = vsyncadd [#allocation7], %s27
      %s30 = sshll.u32 [#allocation6], 4
      %s31 = int_to_ptr.vmem [resolvable:$true] %s30
      %33 = dma.hbm_to_vmem [thread:$0]  %s2, 128, %s31, [#allocation7]
    $region13: #{tpu_custom_call.1} parent=1 // pred_fallthru
      _
    // Predicated region
    $region14: #{tpu_custom_call.1} parent=1 // pred_check
      _
    $region15: #{tpu_custom_call.1} parent=1 // pred_check_branch
      %35 = sbr.rel (0) target = $region17
    $region16: #{tpu_custom_call.1} parent=1 // pred_region
      %36 = dma.done [#allocation4], 128
    $region17: #{tpu_custom_call.1} parent=1 // pred_fallthru
      _
    // Predicated region
    $region18: #{tpu_custom_call.1} parent=1 // pred_check
      _
    $region19: #{tpu_custom_call.1} parent=1 // pred_check_branch
      %38 = sbr.rel (0) target = $region21
    $region20: #{tpu_custom_call.1} parent=1 // pred_region
      %39 = dma.done [#allocation7], 128
    $region21: #{tpu_custom_call.1} parent=1 // pred_fallthru
      _
    %v40 = vld [vmem:[#allocation3] sm:$0xff]
    %v41 = vld [vmem:[#allocation6] sm:$0xff]
    %43 = vrot.lane.b32.xlu0 %v41, 32
    %v44 = vpop.permute.xlu0 %43
    %vm46 = vcmask 261120
    %v47 = vsel %vm46, %v41, %v44
    %v48 = vadd.f32 %v40, %v47
    %vm49 = vcmask 523264
    %50 = vst.msk [vmem:[#allocation8] sm:$0xff] %vm49, %v48
    // Predicated region
    $region22: #{tpu_custom_call.1} parent=1 // pred_check
      _
    $region23: #{tpu_custom_call.1} parent=1 // pred_check_branch
      %52 = sbr.rel (0) target = $region25
    $region24: #{tpu_custom_call.1} parent=1 // pred_region
      %s54 = ssub.s32 128, 128
      %55 = vsyncadd [#allocation5], %s54
      %s57 = sshll.u32 [#allocation8], 4
      %s58 = int_to_ptr.vmem [resolvable:$true] %s57
      %60 = dma.vmem_to_hbm [thread:$0]  %s58, 128, %s3, [#allocation5]
    $region25: #{tpu_custom_call.1} parent=1 // pred_fallthru
      _
    // Predicated region
    $region26: #{tpu_custom_call.1} parent=1 // pred_check
      _
    $region27: #{tpu_custom_call.1} parent=1 // pred_check_branch
      %62 = sbr.rel (0) target = $region29
    $region28: #{tpu_custom_call.1} parent=1 // pred_region
      %63 = dma.done [#allocation5], 128
    $region29: #{tpu_custom_call.1} parent=1 // pred_fallthru
      _
    %64 = vsyncpa [#allocation4], 1
    %65 = vsyncpa [#allocation7], 1
    %66 = vsyncpa [#allocation5], 1

</llo_original>
